<compile_context>
chip_gen: v7x
topology: tpu7x:2x2x1
jax: 0.10.0
libtpu: 0.0.40
codegen_flags: <defaults>
</compile_context>

<pallas_src>
import jax
import jax.numpy as jnp
from jax.experimental import pallas as pl
from jax.experimental.pallas import tpu as pltpu


def actor_kernel(
    feature_ref,   # (TB, feature_dim)
    x_ref,         # (TB, E*dim)      lane-dense packed move inputs
    w1_ref,        # (E*dim, E*64)    block-diagonal embedder layer 1
    b1_ref,        # (1, E*64)
    w2_ref,        # (E*64, E)        block-diagonal embedder layer 2
    b2_ref,        # (1, E)
    wf_feat_ref,   # (feature_dim, 64) rows 0..feature_dim-1 of embedder_final weight
    wf_mov_ref,    # (E, 64)           rows feature_dim..     of embedder_final weight
    bf_ref,        # (1, 64)
    wa_ref,        # (64, 16)
    ba_ref,        # (1, 16)
    wb_ref,        # (16, optimizer_num)
    bb_ref,        # (1, optimizer_num)
    out_ref,       # (TB, optimizer_num)  softmax probabilities
):
    # Per-optimizer embedders as two block-diagonal, lane-dense matmuls.
    h = jnp.dot(x_ref[...], w1_ref[...],
                preferred_element_type=jnp.float32) + b1_ref[...]           # (TB, E*64)
    h = jnp.maximum(h, 0.0)
    m = jnp.dot(h, w2_ref[...],
                preferred_element_type=jnp.float32) + b2_ref[...]           # (TB, E)
    m = jnp.maximum(m, 0.0)

    # embedder_final: cat(feature, moves) @ Wf + bf, split by input rows.
    acc = jnp.dot(feature_ref[...], wf_feat_ref[...],
                  preferred_element_type=jnp.float32)
    acc = acc + jnp.dot(m, wf_mov_ref[...], preferred_element_type=jnp.float32)
    feat = jnp.tanh(acc + bf_ref[...])                                      # (TB, 64)

    # model head: Linear(64,16) -> Tanh -> Linear(16, optimizer_num) -> Softmax(dim=-1)
    h2 = jnp.tanh(jnp.dot(feat, wa_ref[...],
                          preferred_element_type=jnp.float32) + ba_ref[...])  # (TB, 16)
    logits = jnp.dot(h2, wb_ref[...],
                     preferred_element_type=jnp.float32) + bb_ref[...]        # (TB, opt)

    # Numerically-stable exact softmax (exact divide: rows must sum to 1).
    mx = jnp.max(logits, axis=-1, keepdims=True)
    e = jnp.exp(logits - mx)
    denom = jnp.sum(e, axis=-1, keepdims=True)
    out_ref[...] = e / denom


def _round_up(a, m):
    return ((a + m - 1) // m) * m


def actor_forward(feature, xs, packed, *, tile_b=None):
    """feature: (B, feature_dim), xs: (E, B, dim), packed: output of pack_params.

    Small B (<=256): single grid point, everything resident in VMEM.
    Larger B: 1-D grid over batch tiles, marked 'parallel' (engages both TCs on v7x).
    """
    B, feature_dim = feature.shape
    E, _, dim = xs.shape
    optimizer_num = packed["wb"].shape[1]

    # Lane-dense input packing: (E, B, dim) -> (B, E*dim). Plain-JAX glue, fused by XLA.
    x = jnp.transpose(xs, (1, 0, 2)).reshape(B, E * dim)

    if tile_b is None:
        tile_b = min(256, _round_up(B, 8))
    tile_b = max(8, _round_up(tile_b, 8))
    b_pad = _round_up(B, tile_b)
    if b_pad != B:
        feature = jnp.pad(feature, ((0, b_pad - B), (0, 0)))
        x = jnp.pad(x, ((0, b_pad - B), (0, 0)))

    grid = (b_pad // tile_b,)

    def row_spec(cols):
        return pl.BlockSpec((tile_b, cols), lambda i: (i, 0))

    def full_spec(shape):
        return pl.BlockSpec(shape, lambda i: (0, 0))

    weights = (packed["w1_bd"], packed["b1"], packed["w2_bd"], packed["b2"],
               packed["wf_feat"], packed["wf_mov"], packed["bf"],
               packed["wa"], packed["ba"], packed["wb"], packed["bb"])

    out = pl.pallas_call(
        actor_kernel,
        out_shape=jax.ShapeDtypeStruct((b_pad, optimizer_num), jnp.float32),
        grid=grid,
        in_specs=[row_spec(feature_dim), row_spec(E * dim)]
                 + [full_spec(w.shape) for w in weights],
        out_specs=row_spec(optimizer_num),
        compiler_params=pltpu.CompilerParams(dimension_semantics=("parallel",)),
    )(feature, x, *weights)
    return out[:B]


def init_params(key, dim, optimizer_num, feature_dim):
    """Raw per-optimizer params mirroring the PyTorch module structure."""
    E = 2 * optimizer_num
    ks = jax.random.split(key, 10)
    s = 0.1
    return {
        "w1": s * jax.random.normal(ks[0], (E, dim, 64), jnp.float32),
        "b1": s * jax.random.normal(ks[1], (E, 1, 64), jnp.float32),
        "w2": s * jax.random.normal(ks[2], (E, 64, 1), jnp.float32),
        "b2": s * jax.random.normal(ks[3], (E, 1, 1), jnp.float32),
        "wf_feat": s * jax.random.normal(ks[4], (feature_dim, 64), jnp.float32),
        "wf_mov": s * jax.random.normal(ks[5], (E, 1, 64), jnp.float32),
        "bf": s * jax.random.normal(ks[6], (1, 64), jnp.float32),
        "wa": s * jax.random.normal(ks[7], (64, 16), jnp.float32),
        "ba": s * jax.random.normal(ks[8], (1, 16), jnp.float32),
        "wb": s * jax.random.normal(ks[9], (16, optimizer_num), jnp.float32),
        "bb": jnp.zeros((1, optimizer_num), jnp.float32),
    }


def pack_params(raw):
    """One-time (per param set) packing into block-diagonal, lane-dense kernel operands."""
    E, dim, H = raw["w1"].shape
    eye = jnp.eye(E, dtype=jnp.float32)
    # W1_bd[e*dim+d, f*H+h] = (e==f) * w1[e,d,h]
    w1_bd = jnp.einsum("ef,edh->edfh", eye, raw["w1"]).reshape(E * dim, E * H)
    # W2_bd[e*H+h, f] = (e==f) * w2[e,h,0]
    w2_bd = jnp.einsum("ef,eh->ehf", eye, raw["w2"][:, :, 0]).reshape(E * H, E)
    return {
        "w1_bd": w1_bd,
        "b1": raw["b1"].reshape(1, E * H),
        "w2_bd": w2_bd,
        "b2": raw["b2"].reshape(1, E),
        "wf_feat": raw["wf_feat"],
        "wf_mov": raw["wf_mov"][:, 0, :],
        "bf": raw["bf"],
        "wa": raw["wa"],
        "ba": raw["ba"],
        "wb": raw["wb"],
        "bb": raw["bb"],
    }


def actor_reference(feature, xs, raw):
    """Pure-JAX reference mirroring the PyTorch forward (for sanity checking)."""
    E = xs.shape[0]
    moves = []
    for i in range(E):
        h = jnp.maximum(xs[i] @ raw["w1"][i] + raw["b1"][i], 0.0)
        m = jnp.maximum(h @ raw["w2"][i] + raw["b2"][i], 0.0)
        moves.append(m)
    moves = jnp.concatenate(moves, axis=-1)                       # (B, E)
    wf = jnp.concatenate([raw["wf_feat"], raw["wf_mov"][:, 0, :]], axis=0)
    cat = jnp.concatenate([feature, moves], axis=-1)
    feat = jnp.tanh(cat @ wf + raw["bf"])
    h2 = jnp.tanh(feat @ raw["wa"] + raw["ba"])
    logits = h2 @ raw["wb"] + raw["bb"]
    return jax.nn.softmax(logits, axis=-1)


if __name__ == "__main__":
    # Small, forward-consistent shapes.
    B, dim, optimizer_num, feature_dim = 8, 32, 4, 16
    E = 2 * optimizer_num

    key = jax.random.PRNGKey(0)
    k_feat, k_xs, k_par = jax.random.split(key, 3)

    feature = jax.random.normal(k_feat, (B, feature_dim), jnp.float32)   # obs[:, 0]
    xs = jax.random.normal(k_xs, (E, B, dim), jnp.float32)               # obs[:, 1:]
    raw = init_params(k_par, dim, optimizer_num, feature_dim)
    packed = pack_params(raw)   # done once per param set, not per step

    out = actor_forward(feature, xs, packed)
    out = jax.block_until_ready(out)

    ref = actor_reference(feature, xs, raw)
    assert out.shape == (B, optimizer_num)
    assert jnp.allclose(out, ref, atol=1e-5, rtol=1e-5), "mismatch vs reference"
    assert jnp.allclose(jnp.sum(out, axis=-1), 1.0, atol=1e-5)

    print("KERNEL_OK")
</pallas_src>

<mosaic_0001>
module attributes {stable_mosaic.version = 11 : i64} {
  func.func @actor_kernel(%arg0: i32, %arg1: memref<8x16xf32, #tpu.memory_space<vmem>>, %arg2: memref<8x256xf32, #tpu.memory_space<vmem>>, %arg3: memref<256x512xf32, #tpu.memory_space<vmem>>, %arg4: memref<1x512xf32, #tpu.memory_space<vmem>>, %arg5: memref<512x8xf32, #tpu.memory_space<vmem>>, %arg6: memref<1x8xf32, #tpu.memory_space<vmem>>, %arg7: memref<16x64xf32, #tpu.memory_space<vmem>>, %arg8: memref<8x64xf32, #tpu.memory_space<vmem>>, %arg9: memref<1x64xf32, #tpu.memory_space<vmem>>, %arg10: memref<64x16xf32, #tpu.memory_space<vmem>>, %arg11: memref<1x16xf32, #tpu.memory_space<vmem>>, %arg12: memref<16x4xf32, #tpu.memory_space<vmem>>, %arg13: memref<1x4xf32, #tpu.memory_space<vmem>>, %arg14: memref<8x4xf32, #tpu.memory_space<vmem>>) attributes {dimension_semantics = [#tpu.dimension_semantics<parallel>], iteration_bounds = array<i64: 1>, scalar_prefetch = 0 : i64, scratch_operands = 0 : i64, tpu.core_type = #tpu.core_type<tc>, window_params = [{transform_indices = @transform_0, window_bounds = array<i64: 8, 16>}, {transform_indices = @transform_1, window_bounds = array<i64: 8, 256>}, {pipeline_mode = #tpu.pipeline_mode<synchronous>, transform_indices = @transform_2, window_bounds = array<i64: 256, 512>}, {pipeline_mode = #tpu.pipeline_mode<synchronous>, transform_indices = @transform_3, window_bounds = array<i64: 1, 512>}, {pipeline_mode = #tpu.pipeline_mode<synchronous>, transform_indices = @transform_4, window_bounds = array<i64: 512, 8>}, {pipeline_mode = #tpu.pipeline_mode<synchronous>, transform_indices = @transform_5, window_bounds = array<i64: 1, 8>}, {pipeline_mode = #tpu.pipeline_mode<synchronous>, transform_indices = @transform_6, window_bounds = array<i64: 16, 64>}, {pipeline_mode = #tpu.pipeline_mode<synchronous>, transform_indices = @transform_7, window_bounds = array<i64: 8, 64>}, {pipeline_mode = #tpu.pipeline_mode<synchronous>, transform_indices = @transform_8, window_bounds = array<i64: 1, 64>}, {pipeline_mode = #tpu.pipeline_mode<synchronous>, transform_indices = @transform_9, window_bounds = array<i64: 64, 16>}, {pipeline_mode = #tpu.pipeline_mode<synchronous>, transform_indices = @transform_10, window_bounds = array<i64: 1, 16>}, {pipeline_mode = #tpu.pipeline_mode<synchronous>, transform_indices = @transform_11, window_bounds = array<i64: 16, 4>}, {pipeline_mode = #tpu.pipeline_mode<synchronous>, transform_indices = @transform_12, window_bounds = array<i64: 1, 4>}, {transform_indices = @transform_13, window_bounds = array<i64: 8, 4>}]} {
    %c0 = arith.constant 0 : index
    %c0_0 = arith.constant 0 : index
    %0 = vector.load %arg2[%c0, %c0_0] : memref<8x256xf32, #tpu.memory_space<vmem>>, vector<8x256xf32>
    %c0_1 = arith.constant 0 : index
    %c0_2 = arith.constant 0 : index
    %1 = vector.load %arg3[%c0_1, %c0_2] : memref<256x512xf32, #tpu.memory_space<vmem>>, vector<256x512xf32>
    %cst = arith.constant dense<0.000000e+00> : vector<8x512xf32>
    %2 = tpu.matmul %0, %1, %cst {dimension_numbers = #tpu.dot_dimension_numbers<[1], [0], [0], [1], [0, 0, 1, 1], [], []>} : vector<8x256xf32>, vector<256x512xf32>, vector<8x512xf32> -> vector<8x512xf32>
    %c0_3 = arith.constant 0 : index
    %c0_4 = arith.constant 0 : index
    %3 = vector.load %arg4[%c0_3, %c0_4] : memref<1x512xf32, #tpu.memory_space<vmem>>, vector<1x512xf32>
    %4 = vector.broadcast %3 : vector<1x512xf32> to vector<8x512xf32>
    %5 = arith.addf %2, %4 : vector<8x512xf32>
    %cst_5 = arith.constant 0.000000e+00 : f32
    %6 = vector.broadcast %cst_5 : f32 to vector<8x512xf32>
    %7 = arith.maximumf %5, %6 : vector<8x512xf32>
    %c0_6 = arith.constant 0 : index
    %c0_7 = arith.constant 0 : index
    %8 = vector.load %arg5[%c0_6, %c0_7] : memref<512x8xf32, #tpu.memory_space<vmem>>, vector<512x8xf32>
    %cst_8 = arith.constant dense<0.000000e+00> : vector<8x8xf32>
    %9 = tpu.matmul %7, %8, %cst_8 {dimension_numbers = #tpu.dot_dimension_numbers<[1], [0], [0], [1], [0, 0, 1, 1], [], []>} : vector<8x512xf32>, vector<512x8xf32>, vector<8x8xf32> -> vector<8x8xf32>
    %c0_9 = arith.constant 0 : index
    %c0_10 = arith.constant 0 : index
    %10 = vector.load %arg6[%c0_9, %c0_10] : memref<1x8xf32, #tpu.memory_space<vmem>>, vector<1x8xf32>
    %11 = vector.broadcast %10 : vector<1x8xf32> to vector<8x8xf32>
    %12 = arith.addf %9, %11 : vector<8x8xf32>
    %cst_11 = arith.constant 0.000000e+00 : f32
    %13 = vector.broadcast %cst_11 : f32 to vector<8x8xf32>
    %14 = arith.maximumf %12, %13 : vector<8x8xf32>
    %c0_12 = arith.constant 0 : index
    %c0_13 = arith.constant 0 : index
    %15 = vector.load %arg1[%c0_12, %c0_13] : memref<8x16xf32, #tpu.memory_space<vmem>>, vector<8x16xf32>
    %c0_14 = arith.constant 0 : index
    %c0_15 = arith.constant 0 : index
    %16 = vector.load %arg7[%c0_14, %c0_15] : memref<16x64xf32, #tpu.memory_space<vmem>>, vector<16x64xf32>
    %cst_16 = arith.constant dense<0.000000e+00> : vector<8x64xf32>
    %17 = tpu.matmul %15, %16, %cst_16 {dimension_numbers = #tpu.dot_dimension_numbers<[1], [0], [0], [1], [0, 0, 1, 1], [], []>} : vector<8x16xf32>, vector<16x64xf32>, vector<8x64xf32> -> vector<8x64xf32>
    %c0_17 = arith.constant 0 : index
    %c0_18 = arith.constant 0 : index
    %18 = vector.load %arg8[%c0_17, %c0_18] : memref<8x64xf32, #tpu.memory_space<vmem>>, vector<8x64xf32>
    %cst_19 = arith.constant dense<0.000000e+00> : vector<8x64xf32>
    %19 = tpu.matmul %14, %18, %cst_19 {dimension_numbers = #tpu.dot_dimension_numbers<[1], [0], [0], [1], [0, 0, 1, 1], [], []>} : vector<8x8xf32>, vector<8x64xf32>, vector<8x64xf32> -> vector<8x64xf32>
    %20 = arith.addf %17, %19 : vector<8x64xf32>
    %c0_20 = arith.constant 0 : index
    %c0_21 = arith.constant 0 : index
    %21 = vector.load %arg9[%c0_20, %c0_21] : memref<1x64xf32, #tpu.memory_space<vmem>>, vector<1x64xf32>
    %22 = vector.broadcast %21 : vector<1x64xf32> to vector<8x64xf32>
    %23 = arith.addf %20, %22 : vector<8x64xf32>
    %24 = math.tanh %23 : vector<8x64xf32>
    %c0_22 = arith.constant 0 : index
    %c0_23 = arith.constant 0 : index
    %25 = vector.load %arg10[%c0_22, %c0_23] : memref<64x16xf32, #tpu.memory_space<vmem>>, vector<64x16xf32>
    %cst_24 = arith.constant dense<0.000000e+00> : vector<8x16xf32>
    %26 = tpu.matmul %24, %25, %cst_24 {dimension_numbers = #tpu.dot_dimension_numbers<[1], [0], [0], [1], [0, 0, 1, 1], [], []>} : vector<8x64xf32>, vector<64x16xf32>, vector<8x16xf32> -> vector<8x16xf32>
    %c0_25 = arith.constant 0 : index
    %c0_26 = arith.constant 0 : index
    %27 = vector.load %arg11[%c0_25, %c0_26] : memref<1x16xf32, #tpu.memory_space<vmem>>, vector<1x16xf32>
    %28 = vector.broadcast %27 : vector<1x16xf32> to vector<8x16xf32>
    %29 = arith.addf %26, %28 : vector<8x16xf32>
    %30 = math.tanh %29 : vector<8x16xf32>
    %c0_27 = arith.constant 0 : index
    %c0_28 = arith.constant 0 : index
    %31 = vector.load %arg12[%c0_27, %c0_28] : memref<16x4xf32, #tpu.memory_space<vmem>>, vector<16x4xf32>
    %cst_29 = arith.constant dense<0.000000e+00> : vector<8x4xf32>
    %32 = tpu.matmul %30, %31, %cst_29 {dimension_numbers = #tpu.dot_dimension_numbers<[1], [0], [0], [1], [0, 0, 1, 1], [], []>} : vector<8x16xf32>, vector<16x4xf32>, vector<8x4xf32> -> vector<8x4xf32>
    %c0_30 = arith.constant 0 : index
    %c0_31 = arith.constant 0 : index
    %33 = vector.load %arg13[%c0_30, %c0_31] : memref<1x4xf32, #tpu.memory_space<vmem>>, vector<1x4xf32>
    %34 = vector.broadcast %33 : vector<1x4xf32> to vector<8x4xf32>
    %35 = arith.addf %32, %34 : vector<8x4xf32>
    %cst_32 = arith.constant dense<0xFF800000> : vector<8xf32>
    %36 = vector.multi_reduction <maximumf>, %35, %cst_32 [1] : vector<8x4xf32> to vector<8xf32>
    %37 = vector.shape_cast %36 : vector<8xf32> to vector<8x1xf32>
    %38 = vector.broadcast %37 : vector<8x1xf32> to vector<8x4xf32>
    %39 = arith.subf %35, %38 : vector<8x4xf32>
    %40 = math.exp %39 : vector<8x4xf32>
    %cst_33 = arith.constant dense<0.000000e+00> : vector<8xf32>
    %41 = vector.multi_reduction <add>, %40, %cst_33 [1] : vector<8x4xf32> to vector<8xf32>
    %42 = vector.shape_cast %41 : vector<8xf32> to vector<8x1xf32>
    %43 = vector.broadcast %42 : vector<8x1xf32> to vector<8x4xf32>
    %44 = arith.divf %40, %43 : vector<8x4xf32>
    %c0_34 = arith.constant 0 : index
    %c0_35 = arith.constant 0 : index
    %45 = vector.load %arg14[%c0_34, %c0_35] : memref<8x4xf32, #tpu.memory_space<vmem>>, vector<8x4xf32>
    tpu.vector_store %arg14[%c0_34, %c0_35], %44 {strides = array<i32>} : memref<8x4xf32, #tpu.memory_space<vmem>>, vector<8x4xf32>,
    return
  }
  func.func @transform_0(%arg0: i32) -> (i32, i32) {
    %c0_i32 = arith.constant 0 : i32
    %c0_i32_0 = arith.constant 0 : i32
    return %arg0, %c0_i32 : i32, i32
  }
  func.func @transform_1(%arg0: i32) -> (i32, i32) {
    %c0_i32 = arith.constant 0 : i32
    %c0_i32_0 = arith.constant 0 : i32
    return %arg0, %c0_i32 : i32, i32
  }
  func.func @transform_2(%arg0: i32) -> (i32, i32) {
    %c0_i32 = arith.constant 0 : i32
    %c0_i32_0 = arith.constant 0 : i32
    %c0_i32_1 = arith.constant 0 : i32
    return %c0_i32, %c0_i32_0 : i32, i32
  }
  func.func @transform_3(%arg0: i32) -> (i32, i32) {
    %c0_i32 = arith.constant 0 : i32
    %c0_i32_0 = arith.constant 0 : i32
    %c0_i32_1 = arith.constant 0 : i32
    return %c0_i32, %c0_i32_0 : i32, i32
  }
  func.func @transform_4(%arg0: i32) -> (i32, i32) {
    %c0_i32 = arith.constant 0 : i32
    %c0_i32_0 = arith.constant 0 : i32
    %c0_i32_1 = arith.constant 0 : i32
    return %c0_i32, %c0_i32_0 : i32, i32
  }
  func.func @transform_5(%arg0: i32) -> (i32, i32) {
    %c0_i32 = arith.constant 0 : i32
    %c0_i32_0 = arith.constant 0 : i32
    %c0_i32_1 = arith.constant 0 : i32
    return %c0_i32, %c0_i32_0 : i32, i32
  }
  func.func @transform_6(%arg0: i32) -> (i32, i32) {
    %c0_i32 = arith.constant 0 : i32
    %c0_i32_0 = arith.constant 0 : i32
    %c0_i32_1 = arith.constant 0 : i32
    return %c0_i32, %c0_i32_0 : i32, i32
  }
  func.func @transform_7(%arg0: i32) -> (i32, i32) {
    %c0_i32 = arith.constant 0 : i32
    %c0_i32_0 = arith.constant 0 : i32
    %c0_i32_1 = arith.constant 0 : i32
    return %c0_i32, %c0_i32_0 : i32, i32
  }
  func.func @transform_8(%arg0: i32) -> (i32, i32) {
    %c0_i32 = arith.constant 0 : i32
    %c0_i32_0 = arith.constant 0 : i32
    %c0_i32_1 = arith.constant 0 : i32
    return %c0_i32, %c0_i32_0 : i32, i32
  }
  func.func @transform_9(%arg0: i32) -> (i32, i32) {
    %c0_i32 = arith.constant 0 : i32
    %c0_i32_0 = arith.constant 0 : i32
    %c0_i32_1 = arith.constant 0 : i32
    return %c0_i32, %c0_i32_0 : i32, i32
  }
  func.func @transform_10(%arg0: i32) -> (i32, i32) {
    %c0_i32 = arith.constant 0 : i32
    %c0_i32_0 = arith.constant 0 : i32
    %c0_i32_1 = arith.constant 0 : i32
    return %c0_i32, %c0_i32_0 : i32, i32
  }
  func.func @transform_11(%arg0: i32) -> (i32, i32) {
    %c0_i32 = arith.constant 0 : i32
    %c0_i32_0 = arith.constant 0 : i32
    %c0_i32_1 = arith.constant 0 : i32
    return %c0_i32, %c0_i32_0 : i32, i32
  }
  func.func @transform_12(%arg0: i32) -> (i32, i32) {
    %c0_i32 = arith.constant 0 : i32
    %c0_i32_0 = arith.constant 0 : i32
    %c0_i32_1 = arith.constant 0 : i32
    return %c0_i32, %c0_i32_0 : i32, i32
  }
  func.func @transform_13(%arg0: i32) -> (i32, i32) {
    %c0_i32 = arith.constant 0 : i32
    %c0_i32_0 = arith.constant 0 : i32
    return %arg0, %c0_i32 : i32, i32
  }
}

</mosaic_0001>

<llo_original>
// kernel: tpu_custom_call.1
$region0: #{tpu_custom_call.1}
  #allocation0 [shape = 'u32[]', space=smem, size = 0x4, offset = 0x4, fixed_abs, tag = 'smem constant byte address 0x4 - core index']
  #allocation1 [shape = 'u32[144,128]{1,0:T(1,128)}', space=vmem, size = 0x12000, scoped, tag = 'internal scratch']
  %s0 = inlined_call_operand.vmem [shape: f32[8,16], index: 0, kind: input, shape index: {}]
  %s1 = inlined_call_operand.vmem [shape: f32[8,256], index: 1, kind: input, shape index: {}]
  %s2 = inlined_call_operand.hbm [shape: f32[256,512], index: 2, kind: input, shape index: {}]
  %s3 = inlined_call_operand.vmem [shape: f32[1,512], index: 3, kind: input, shape index: {}]
  %s4 = inlined_call_operand.vmem [shape: f32[512,8], index: 4, kind: input, shape index: {}]
  %s5 = inlined_call_operand.vmem [shape: f32[1,8], index: 5, kind: input, shape index: {}]
  %s6 = inlined_call_operand.vmem [shape: f32[16,64], index: 6, kind: input, shape index: {}]
  %s7 = inlined_call_operand.vmem [shape: f32[8,64], index: 7, kind: input, shape index: {}]
  %s8 = inlined_call_operand.vmem [shape: f32[1,64], index: 8, kind: input, shape index: {}]
  %s9 = inlined_call_operand.vmem [shape: f32[64,16], index: 9, kind: input, shape index: {}]
  %s10 = inlined_call_operand.vmem [shape: f32[1,16], index: 10, kind: input, shape index: {}]
  %s11 = inlined_call_operand.vmem [shape: f32[16,4], index: 11, kind: input, shape index: {}]
  %s12 = inlined_call_operand.vmem [shape: f32[1,4], index: 12, kind: input, shape index: {}]
  %s13 = inlined_call_operand.vmem [shape: f32[8,4], index: 13, kind: output, shape index: {}]
  %s14 = sld [smem:[#allocation0]]
  $region66: #{tpu_custom_call.1} parent=0
    _
  %s16 = ssub.s32 1, %s14
  %s17 = scalar_select 0, %s16, %s14
  $region1: #{tpu_custom_call.1} parent=0
    #allocation2 [shape = 'u8[524288]{0}', space=vmem, size = 0x80000, scoped, tag = 'input window, operand 2, single buffered']
    #allocation3 [shape = 's32[1]{0}', space=sflag, size = 0x4, scoped, tag = 'scoped memory for tpu_custom_call.1']
    %18 = vsyncpa [#allocation3], 0
    // Predicated region
    $region2: #{tpu_custom_call.1} parent=1 // pred_check
      _
    $region3: #{tpu_custom_call.1} parent=1 // pred_check_branch
      %20 = sbr.rel (0) target = $region5
    $region4: #{tpu_custom_call.1} parent=1 // pred_region
      _
    $region5: #{tpu_custom_call.1} parent=1 // pred_fallthru
      _
    // Predicated region
    $region6: #{tpu_custom_call.1} parent=1 // pred_check
      _
    $region7: #{tpu_custom_call.1} parent=1 // pred_check_branch
      %22 = sbr.rel (0) target = $region9
    $region8: #{tpu_custom_call.1} parent=1 // pred_region
      _
    $region9: #{tpu_custom_call.1} parent=1 // pred_fallthru
      _
    // Predicated region
    $region10: #{tpu_custom_call.1} parent=1 // pred_check
      _
    $region11: #{tpu_custom_call.1} parent=1 // pred_check_branch
      %24 = sbr.rel (0) target = $region13
    $region12: #{tpu_custom_call.1} parent=1 // pred_region
      %s26 = ssub.s32 16384, 16384
      %27 = vsyncadd [#allocation3], %s26
      %s28 = sshll.u32 [#allocation2], 4
      %s29 = int_to_ptr.vmem [resolvable:$true] %s28
      %34 = dma.hbm_to_vmem [thread:$0]  %s2, 16384, %s29, [#allocation3], 512, 512, 32
    $region13: #{tpu_custom_call.1} parent=1 // pred_fallthru
      _
    // Predicated region
    $region14: #{tpu_custom_call.1} parent=1 // pred_check
      _
    $region15: #{tpu_custom_call.1} parent=1 // pred_check_branch
      %36 = sbr.rel (0) target = $region17
    $region16: #{tpu_custom_call.1} parent=1 // pred_region
      _
    $region17: #{tpu_custom_call.1} parent=1 // pred_fallthru
      _
    // Predicated region
    $region18: #{tpu_custom_call.1} parent=1 // pred_check
      _
    $region19: #{tpu_custom_call.1} parent=1 // pred_check_branch
      %38 = sbr.rel (0) target = $region21
    $region20: #{tpu_custom_call.1} parent=1 // pred_region
      _
    $region21: #{tpu_custom_call.1} parent=1 // pred_fallthru
      _
    // Predicated region
    $region22: #{tpu_custom_call.1} parent=1 // pred_check
      _
    $region23: #{tpu_custom_call.1} parent=1 // pred_check_branch
      %40 = sbr.rel (0) target = $region25
    $region24: #{tpu_custom_call.1} parent=1 // pred_region
      _
    $region25: #{tpu_custom_call.1} parent=1 // pred_fallthru
      _
    // Predicated region
    $region26: #{tpu_custom_call.1} parent=1 // pred_check
      _
    $region27: #{tpu_custom_call.1} parent=1 // pred_check_branch
      %42 = sbr.rel (0) target = $region29
    $region28: #{tpu_custom_call.1} parent=1 // pred_region
      _
    $region29: #{tpu_custom_call.1} parent=1 // pred_fallthru
      _
    // Predicated region
    $region30: #{tpu_custom_call.1} parent=1 // pred_check
      _
    $region31: #{tpu_custom_call.1} parent=1 // pred_check_branch
      %44 = sbr.rel (0) target = $region33
    $region32: #{tpu_custom_call.1} parent=1 // pred_region
      _
    $region33: #{tpu_custom_call.1} parent=1 // pred_fallthru
      _
    // Predicated region
    $region34: #{tpu_custom_call.1} parent=1 // pred_check
      _
    $region35: #{tpu_custom_call.1} parent=1 // pred_check_branch
      %46 = sbr.rel (0) target = $region37
    $region36: #{tpu_custom_call.1} parent=1 // pred_region
      _
    $region37: #{tpu_custom_call.1} parent=1 // pred_fallthru
      _
    // Predicated region
    $region38: #{tpu_custom_call.1} parent=1 // pred_check
      _
    $region39: #{tpu_custom_call.1} parent=1 // pred_check_branch
      %48 = sbr.rel (0) target = $region41
    $region40: #{tpu_custom_call.1} parent=1 // pred_region
      _
    $region41: #{tpu_custom_call.1} parent=1 // pred_fallthru
      _
    // Predicated region
    $region42: #{tpu_custom_call.1} parent=1 // pred_check
      _
    $region43: #{tpu_custom_call.1} parent=1 // pred_check_branch
      %50 = sbr.rel (0) target = $region45
    $region44: #{tpu_custom_call.1} parent=1 // pred_region
      _
    $region45: #{tpu_custom_call.1} parent=1 // pred_fallthru
      _
    // Predicated region
    $region46: #{tpu_custom_call.1} parent=1 // pred_check
      _
    $region47: #{tpu_custom_call.1} parent=1 // pred_check_branch
      %52 = sbr.rel (0) target = $region49
    $region48: #{tpu_custom_call.1} parent=1 // pred_region
      _
    $region49: #{tpu_custom_call.1} parent=1 // pred_fallthru
      _
    // Predicated region
    $region50: #{tpu_custom_call.1} parent=1 // pred_check
      _
    $region51: #{tpu_custom_call.1} parent=1 // pred_check_branch
      %54 = sbr.rel (0) target = $region53
    $region52: #{tpu_custom_call.1} parent=1 // pred_region
      _
    $region53: #{tpu_custom_call.1} parent=1 // pred_fallthru
      _
    // Predicated region
    $region54: #{tpu_custom_call.1} parent=1 // pred_check
      _
    $region55: #{tpu_custom_call.1} parent=1 // pred_check_branch
      %56 = sbr.rel (0) target = $region57
    $region56: #{tpu_custom_call.1} parent=1 // pred_region
      %57 = dma.done [#allocation3], 16384
    $region57: #{tpu_custom_call.1} parent=1 // pred_fallthru
      _
    %v58 = vld [vmem:[%s1] sm:$0xff]
    %v59 = vld [vmem:[%s1 + $0x8] sm:$0xff]
    %v60 = vld [vmem:[#allocation2] sm:$0xff]
    %v61 = vld [vmem:[#allocation2 + $0x8] sm:$0xff]
    %v62 = vld [vmem:[#allocation2 + $0x10] sm:$0xff]
    %v63 = vld [vmem:[#allocation2 + $0x18] sm:$0xff]
    %v64 = vld [vmem:[#allocation2 + $0x20] sm:$0xff]
    %v65 = vld [vmem:[#allocation2 + $0x28] sm:$0xff]
    %v66 = vld [vmem:[#allocation2 + $0x30] sm:$0xff]
    %v67 = vld [vmem:[#allocation2 + $0x38] sm:$0xff]
    %v68 = vld [vmem:[#allocation2 + $0x40] sm:$0xff]
    %v69 = vld [vmem:[#allocation2 + $0x48] sm:$0xff]
    %v70 = vld [vmem:[#allocation2 + $0x50] sm:$0xff]
    %v71 = vld [vmem:[#allocation2 + $0x58] sm:$0xff]
    %v72 = vld [vmem:[#allocation2 + $0x60] sm:$0xff]
    %v73 = vld [vmem:[#allocation2 + $0x68] sm:$0xff]
    %v74 = vld [vmem:[#allocation2 + $0x70] sm:$0xff]
    %v75 = vld [vmem:[#allocation2 + $0x78] sm:$0xff]
    %v76 = vld [vmem:[#allocation2 + $0x80] sm:$0xff]
    %v77 = vld [vmem:[#allocation2 + $0x88] sm:$0xff]
    %v78 = vld [vmem:[#allocation2 + $0x90] sm:$0xff]
    %v79 = vld [vmem:[#allocation2 + $0x98] sm:$0xff]
    %v80 = vld [vmem:[#allocation2 + $0xa0] sm:$0xff]
    %v81 = vld [vmem:[#allocation2 + $0xa8] sm:$0xff]
    %v82 = vld [vmem:[#allocation2 + $0xb0] sm:$0xff]
    %v83 = vld [vmem:[#allocation2 + $0xb8] sm:$0xff]
    %v84 = vld [vmem:[#allocation2 + $0xc0] sm:$0xff]
    %v85 = vld [vmem:[#allocation2 + $0xc8] sm:$0xff]
    %v86 = vld [vmem:[#allocation2 + $0xd0] sm:$0xff]
    %v87 = vld [vmem:[#allocation2 + $0xd8] sm:$0xff]
    %v88 = vld [vmem:[#allocation2 + $0xe0] sm:$0xff]
    %v89 = vld [vmem:[#allocation2 + $0xe8] sm:$0xff]
    %v90 = vld [vmem:[#allocation2 + $0xf0] sm:$0xff]
    %v91 = vld [vmem:[#allocation2 + $0xf8] sm:$0xff]
    %v92 = vld [vmem:[#allocation2 + $0x100] sm:$0xff]
    %v93 = vld [vmem:[#allocation2 + $0x108] sm:$0xff]
    %v94 = vld [vmem:[#allocation2 + $0x110] sm:$0xff]
    %v95 = vld [vmem:[#allocation2 + $0x118] sm:$0xff]
    %v96 = vld [vmem:[#allocation2 + $0x120] sm:$0xff]
    %v97 = vld [vmem:[#allocation2 + $0x128] sm:$0xff]
    %v98 = vld [vmem:[#allocation2 + $0x130] sm:$0xff]
    %v99 = vld [vmem:[#allocation2 + $0x138] sm:$0xff]
    %v100 = vld [vmem:[#allocation2 + $0x140] sm:$0xff]
    %v101 = vld [vmem:[#allocation2 + $0x148] sm:$0xff]
    %v102 = vld [vmem:[#allocation2 + $0x150] sm:$0xff]
    %v103 = vld [vmem:[#allocation2 + $0x158] sm:$0xff]
    %v104 = vld [vmem:[#allocation2 + $0x160] sm:$0xff]
    %v105 = vld [vmem:[#allocation2 + $0x168] sm:$0xff]
    %v106 = vld [vmem:[#allocation2 + $0x170] sm:$0xff]
    %v107 = vld [vmem:[#allocation2 + $0x178] sm:$0xff]
    %v108 = vld [vmem:[#allocation2 + $0x180] sm:$0xff]
    %v109 = vld [vmem:[#allocation2 + $0x188] sm:$0xff]
    %v110 = vld [vmem:[#allocation2 + $0x190] sm:$0xff]
    %v111 = vld [vmem:[#allocation2 + $0x198] sm:$0xff]
    %v112 = vld [vmem:[#allocation2 + $0x1a0] sm:$0xff]
    %v113 = vld [vmem:[#allocation2 + $0x1a8] sm:$0xff]
    %v114 = vld [vmem:[#allocation2 + $0x1b0] sm:$0xff]
    %v115 = vld [vmem:[#allocation2 + $0x1b8] sm:$0xff]
    %v116 = vld [vmem:[#allocation2 + $0x1c0] sm:$0xff]
    %v117 = vld [vmem:[#allocation2 + $0x1c8] sm:$0xff]
    %v118 = vld [vmem:[#allocation2 + $0x1d0] sm:$0xff]
    %v119 = vld [vmem:[#allocation2 + $0x1d8] sm:$0xff]
    %v120 = vld [vmem:[#allocation2 + $0x1e0] sm:$0xff]
    %v121 = vld [vmem:[#allocation2 + $0x1e8] sm:$0xff]
    %v122 = vld [vmem:[#allocation2 + $0x1f0] sm:$0xff]
    %v123 = vld [vmem:[#allocation2 + $0x1f8] sm:$0xff]
    %v124 = vld [vmem:[#allocation2 + $0x200] sm:$0xff]
    %v125 = vld [vmem:[#allocation2 + $0x208] sm:$0xff]
    %v126 = vld [vmem:[#allocation2 + $0x210] sm:$0xff]
    %v127 = vld [vmem:[#allocation2 + $0x218] sm:$0xff]
    %v128 = vld [vmem:[#allocation2 + $0x220] sm:$0xff]
    %v129 = vld [vmem:[#allocation2 + $0x228] sm:$0xff]
    %v130 = vld [vmem:[#allocation2 + $0x230] sm:$0xff]
    %v131 = vld [vmem:[#allocation2 + $0x238] sm:$0xff]
    %v132 = vld [vmem:[#allocation2 + $0x240] sm:$0xff]
    %v133 = vld [vmem:[#allocation2 + $0x248] sm:$0xff]
    %v134 = vld [vmem:[#allocation2 + $0x250] sm:$0xff]
    %v135 = vld [vmem:[#allocation2 + $0x258] sm:$0xff]
    %v136 = vld [vmem:[#allocation2 + $0x260] sm:$0xff]
    %v137 = vld [vmem:[#allocation2 + $0x268] sm:$0xff]
    %v138 = vld [vmem:[#allocation2 + $0x270] sm:$0xff]
    %v139 = vld [vmem:[#allocation2 + $0x278] sm:$0xff]
    %v140 = vld [vmem:[#allocation2 + $0x280] sm:$0xff]
    %v141 = vld [vmem:[#allocation2 + $0x288] sm:$0xff]
    %v142 = vld [vmem:[#allocation2 + $0x290] sm:$0xff]
    %v143 = vld [vmem:[#allocation2 + $0x298] sm:$0xff]
    %v144 = vld [vmem:[#allocation2 + $0x2a0] sm:$0xff]
    %v145 = vld [vmem:[#allocation2 + $0x2a8] sm:$0xff]
    %v146 = vld [vmem:[#allocation2 + $0x2b0] sm:$0xff]
    %v147 = vld [vmem:[#allocation2 + $0x2b8] sm:$0xff]
    %v148 = vld [vmem:[#allocation2 + $0x2c0] sm:$0xff]
    %v149 = vld [vmem:[#allocation2 + $0x2c8] sm:$0xff]
    %v150 = vld [vmem:[#allocation2 + $0x2d0] sm:$0xff]
    %v151 = vld [vmem:[#allocation2 + $0x2d8] sm:$0xff]
    %v152 = vld [vmem:[#allocation2 + $0x2e0] sm:$0xff]
    %v153 = vld [vmem:[#allocation2 + $0x2e8] sm:$0xff]
    %v154 = vld [vmem:[#allocation2 + $0x2f0] sm:$0xff]
    %v155 = vld [vmem:[#allocation2 + $0x2f8] sm:$0xff]
    %v156 = vld [vmem:[#allocation2 + $0x300] sm:$0xff]
    %v157 = vld [vmem:[#allocation2 + $0x308] sm:$0xff]
    %v158 = vld [vmem:[#allocation2 + $0x310] sm:$0xff]
    %v159 = vld [vmem:[#allocation2 + $0x318] sm:$0xff]
    %v160 = vld [vmem:[#allocation2 + $0x320] sm:$0xff]
    %v161 = vld [vmem:[#allocation2 + $0x328] sm:$0xff]
    %v162 = vld [vmem:[#allocation2 + $0x330] sm:$0xff]
    %v163 = vld [vmem:[#allocation2 + $0x338] sm:$0xff]
    %v164 = vld [vmem:[#allocation2 + $0x340] sm:$0xff]
    %v165 = vld [vmem:[#allocation2 + $0x348] sm:$0xff]
    %v166 = vld [vmem:[#allocation2 + $0x350] sm:$0xff]
    %v167 = vld [vmem:[#allocation2 + $0x358] sm:$0xff]
    %v168 = vld [vmem:[#allocation2 + $0x360] sm:$0xff]
    %v169 = vld [vmem:[#allocation2 + $0x368] sm:$0xff]
    %v170 = vld [vmem:[#allocation2 + $0x370] sm:$0xff]
    %v171 = vld [vmem:[#allocation2 + $0x378] sm:$0xff]
    %v172 = vld [vmem:[#allocation2 + $0x380] sm:$0xff]
    %v173 = vld [vmem:[#allocation2 + $0x388] sm:$0xff]
    %v174 = vld [vmem:[#allocation2 + $0x390] sm:$0xff]
    %v175 = vld [vmem:[#allocation2 + $0x398] sm:$0xff]
    %v176 = vld [vmem:[#allocation2 + $0x3a0] sm:$0xff]
    %v177 = vld [vmem:[#allocation2 + $0x3a8] sm:$0xff]
    %v178 = vld [vmem:[#allocation2 + $0x3b0] sm:$0xff]
    %v179 = vld [vmem:[#allocation2 + $0x3b8] sm:$0xff]
    %v180 = vld [vmem:[#allocation2 + $0x3c0] sm:$0xff]
    %v181 = vld [vmem:[#allocation2 + $0x3c8] sm:$0xff]
    %v182 = vld [vmem:[#allocation2 + $0x3d0] sm:$0xff]
    %v183 = vld [vmem:[#allocation2 + $0x3d8] sm:$0xff]
    %v184 = vld [vmem:[#allocation2 + $0x3e0] sm:$0xff]
    %v185 = vld [vmem:[#allocation2 + $0x3e8] sm:$0xff]
    %v186 = vld [vmem:[#allocation2 + $0x3f0] sm:$0xff]
    %v187 = vld [vmem:[#allocation2 + $0x3f8] sm:$0xff]
    %v188 = vld [vmem:[%s3] sm:$0xf]
    %v190 = vlaneseq
    %v191 = vshrl.u32 %v190, 7
    %v192 = vsub.s32 0, %v191
    %v193 = vrot.slane %v188, %v192
    %v194 = vlaneseq
    %v195 = vshrl.u32 %v194, 7
    %v196 = vsub.s32 1, %v195
    %v197 = vrot.slane %v188, %v196
    %v198 = vlaneseq
    %v199 = vshrl.u32 %v198, 7
    %v200 = vsub.s32 2, %v199
    %v201 = vrot.slane %v188, %v200
    %v202 = vlaneseq
    %v203 = vshrl.u32 %v202, 7
    %v204 = vsub.s32 3, %v203
    %v205 = vrot.slane %v188, %v204
    %210 = vmatprep.subr.mxu0 %v61
    %211 = vmatpush1.msra.mxu0 %v60
    %212 = vmatprep.subr.mxu0 %v65
    %213 = vmatpush1.msra.mxu0 %v64
    %214 = vmatprep.subr.mxu0 %v69
    %215 = vmatpush1.msra.mxu0 %v68
    %216 = vmatprep.subr.mxu0 %v73
    %217 = vmatpush1.msra.mxu0 %v72
    %218 = vmatprep.subr.mxu0 %v77
    %219 = vmatpush1.msra.mxu0 %v76
    %220 = vmatprep.subr.mxu0 %v81
    %221 = vmatpush1.msra.mxu0 %v80
    %222 = vmatprep.subr.mxu0 %v85
    %223 = vmatpush1.msra.mxu0 %v84
    %224 = vmatprep.subr.mxu0 %v89
    %225 = vmatpush1.msra.mxu0 %v88
    %226 = vmatprep.subr.mxu0 %v93
    %227 = vmatpush1.msra.mxu0 %v92
    %228 = vmatprep.subr.mxu0 %v97
    %229 = vmatpush1.msra.mxu0 %v96
    %230 = vmatprep.subr.mxu0 %v101
    %231 = vmatpush1.msra.mxu0 %v100
    %232 = vmatprep.subr.mxu0 %v105
    %233 = vmatpush1.msra.mxu0 %v104
    %234 = vmatprep.subr.mxu0 %v109
    %235 = vmatpush1.msra.mxu0 %v108
    %236 = vmatprep.subr.mxu0 %v113
    %237 = vmatpush1.msra.mxu0 %v112
    %238 = vmatprep.subr.mxu0 %v117
    %239 = vmatpush1.msra.mxu0 %v116
    %240 = vmatprep.subr.mxu0 %v121
    %241 = vmatpush1.msra.mxu0 %v120
    %242 = vmatprep.subr.mxu0 %v125
    %243 = vmatpush1.msra.mxu0 %v124
    %244 = vmatprep.subr.mxu0 %v129
    %245 = vmatpush1.msra.mxu0 %v128
    %246 = vmatprep.subr.mxu0 %v133
    %247 = vmatpush1.msra.mxu0 %v132
    %248 = vmatprep.subr.mxu0 %v137
    %249 = vmatpush1.msra.mxu0 %v136
    %250 = vmatprep.subr.mxu0 %v141
    %251 = vmatpush1.msra.mxu0 %v140
    %252 = vmatprep.subr.mxu0 %v145
    %253 = vmatpush1.msra.mxu0 %v144
    %254 = vmatprep.subr.mxu0 %v149
    %255 = vmatpush1.msra.mxu0 %v148
    %256 = vmatprep.subr.mxu0 %v153
    %257 = vmatpush1.msra.mxu0 %v152
    %258 = vmatprep.subr.mxu0 %v157
    %259 = vmatpush1.msra.mxu0 %v156
    %260 = vmatprep.subr.mxu0 %v161
    %261 = vmatpush1.msra.mxu0 %v160
    %262 = vmatprep.subr.mxu0 %v165
    %263 = vmatpush1.msra.mxu0 %v164
    %264 = vmatprep.subr.mxu0 %v169
    %265 = vmatpush1.msra.mxu0 %v168
    %266 = vmatprep.subr.mxu0 %v173
    %267 = vmatpush1.msra.mxu0 %v172
    %268 = vmatprep.subr.mxu0 %v177
    %269 = vmatpush1.msra.mxu0 %v176
    %270 = vmatprep.subr.mxu0 %v181
    %271 = vmatpush1.msra.mxu0 %v180
    %272 = vmatprep.subr.mxu0 %v185
    %273 = vmatpush1.msra.mxu0 %v184
    %274 = vmatprep.mubr.f32.mxu0 %v59
    %275 = vmatmul.mubr.f32.gmra.mrb[0].mxu0 %v58
    %v276 = vpop.f32.mrb[0].mxu0
    %v277 = vadd.f32 %v193, %v276
    %v278 = vpop.f32.mrb[0].mxu0
    %v279 = vadd.f32 %v197, %v278
    %280 = vdwg.mxu0
    %281 = vmatprep.subr.mxu0 %v63
    %282 = vmatpush1.msra.mxu0 %v62
    %283 = vmatprep.subr.mxu0 %v67
    %284 = vmatpush1.msra.mxu0 %v66
    %285 = vmatprep.subr.mxu0 %v71
    %286 = vmatpush1.msra.mxu0 %v70
    %287 = vmatprep.subr.mxu0 %v75
    %288 = vmatpush1.msra.mxu0 %v74
    %289 = vmatprep.subr.mxu0 %v79
    %290 = vmatpush1.msra.mxu0 %v78
    %291 = vmatprep.subr.mxu0 %v83
    %292 = vmatpush1.msra.mxu0 %v82
    %293 = vmatprep.subr.mxu0 %v87
    %294 = vmatpush1.msra.mxu0 %v86
    %295 = vmatprep.subr.mxu0 %v91
    %296 = vmatpush1.msra.mxu0 %v90
    %297 = vmatprep.subr.mxu0 %v95
    %298 = vmatpush1.msra.mxu0 %v94
    %299 = vmatprep.subr.mxu0 %v99
    %300 = vmatpush1.msra.mxu0 %v98
    %301 = vmatprep.subr.mxu0 %v103
    %302 = vmatpush1.msra.mxu0 %v102
    %303 = vmatprep.subr.mxu0 %v107
    %304 = vmatpush1.msra.mxu0 %v106
    %305 = vmatprep.subr.mxu0 %v111
    %306 = vmatpush1.msra.mxu0 %v110
    %307 = vmatprep.subr.mxu0 %v115
    %308 = vmatpush1.msra.mxu0 %v114
    %309 = vmatprep.subr.mxu0 %v119
    %310 = vmatpush1.msra.mxu0 %v118
    %311 = vmatprep.subr.mxu0 %v123
    %312 = vmatpush1.msra.mxu0 %v122
    %313 = vmatprep.subr.mxu0 %v127
    %314 = vmatpush1.msra.mxu0 %v126
    %315 = vmatprep.subr.mxu0 %v131
    %316 = vmatpush1.msra.mxu0 %v130
    %317 = vmatprep.subr.mxu0 %v135
    %318 = vmatpush1.msra.mxu0 %v134
    %319 = vmatprep.subr.mxu0 %v139
    %320 = vmatpush1.msra.mxu0 %v138
    %321 = vmatprep.subr.mxu0 %v143
    %322 = vmatpush1.msra.mxu0 %v142
    %323 = vmatprep.subr.mxu0 %v147
    %324 = vmatpush1.msra.mxu0 %v146
    %325 = vmatprep.subr.mxu0 %v151
    %326 = vmatpush1.msra.mxu0 %v150
    %327 = vmatprep.subr.mxu0 %v155
    %328 = vmatpush1.msra.mxu0 %v154
    %329 = vmatprep.subr.mxu0 %v159
    %330 = vmatpush1.msra.mxu0 %v158
    %331 = vmatprep.subr.mxu0 %v163
    %332 = vmatpush1.msra.mxu0 %v162
    %333 = vmatprep.subr.mxu0 %v167
    %334 = vmatpush1.msra.mxu0 %v166
    %335 = vmatprep.subr.mxu0 %v171
    %336 = vmatpush1.msra.mxu0 %v170
    %337 = vmatprep.subr.mxu0 %v175
    %338 = vmatpush1.msra.mxu0 %v174
    %339 = vmatprep.subr.mxu0 %v179
    %340 = vmatpush1.msra.mxu0 %v178
    %341 = vmatprep.subr.mxu0 %v183
    %342 = vmatpush1.msra.mxu0 %v182
    %343 = vmatprep.subr.mxu0 %v187
    %344 = vmatpush1.msra.mxu0 %v186
    %345 = vmatprep.mubr.f32.mxu0 %v59
    %346 = vmatmul.mubr.f32.gmra.mrb[0].mxu0 %v58
    %v347 = vpop.f32.mrb[0].mxu0
    %v348 = vadd.f32 %v201, %v347
    %v349 = vpop.f32.mrb[0].mxu0
    %v350 = vadd.f32 %v205, %v349
    %351 = vdwg.mxu0
    %v352 = vmax.f32 %v277, 0.0
    %v353 = vmax.f32 %v279, 0.0
    %v354 = vmax.f32 %v348, 0.0
    %v355 = vmax.f32 %v350, 0.0
    %v356 = vld [vmem:[%s4] sm:$0xff]
    %v357 = vld [vmem:[%s4 + $0x8] sm:$0xff]
    %v358 = vld [vmem:[%s4 + $0x10] sm:$0xff]
    %v359 = vld [vmem:[%s4 + $0x18] sm:$0xff]
    %v360 = vld [vmem:[%s4 + $0x20] sm:$0xff]
    %v361 = vld [vmem:[%s4 + $0x28] sm:$0xff]
    %v362 = vld [vmem:[%s4 + $0x30] sm:$0xff]
    %v363 = vld [vmem:[%s4 + $0x38] sm:$0xff]
    %v364 = vld [vmem:[%s4 + $0x40] sm:$0xff]
    %v365 = vld [vmem:[%s4 + $0x48] sm:$0xff]
    %v366 = vld [vmem:[%s4 + $0x50] sm:$0xff]
    %v367 = vld [vmem:[%s4 + $0x58] sm:$0xff]
    %v368 = vld [vmem:[%s4 + $0x60] sm:$0xff]
    %v369 = vld [vmem:[%s4 + $0x68] sm:$0xff]
    %v370 = vld [vmem:[%s4 + $0x70] sm:$0xff]
    %v371 = vld [vmem:[%s4 + $0x78] sm:$0xff]
    %v372 = vld [vmem:[%s4 + $0x80] sm:$0xff]
    %v373 = vld [vmem:[%s4 + $0x88] sm:$0xff]
    %v374 = vld [vmem:[%s4 + $0x90] sm:$0xff]
    %v375 = vld [vmem:[%s4 + $0x98] sm:$0xff]
    %v376 = vld [vmem:[%s4 + $0xa0] sm:$0xff]
    %v377 = vld [vmem:[%s4 + $0xa8] sm:$0xff]
    %v378 = vld [vmem:[%s4 + $0xb0] sm:$0xff]
    %v379 = vld [vmem:[%s4 + $0xb8] sm:$0xff]
    %v380 = vld [vmem:[%s4 + $0xc0] sm:$0xff]
    %v381 = vld [vmem:[%s4 + $0xc8] sm:$0xff]
    %v382 = vld [vmem:[%s4 + $0xd0] sm:$0xff]
    %v383 = vld [vmem:[%s4 + $0xd8] sm:$0xff]
    %v384 = vld [vmem:[%s4 + $0xe0] sm:$0xff]
    %v385 = vld [vmem:[%s4 + $0xe8] sm:$0xff]
    %v386 = vld [vmem:[%s4 + $0xf0] sm:$0xff]
    %v387 = vld [vmem:[%s4 + $0xf8] sm:$0xff]
    %v388 = vld [vmem:[%s4 + $0x100] sm:$0xff]
    %v389 = vld [vmem:[%s4 + $0x108] sm:$0xff]
    %v390 = vld [vmem:[%s4 + $0x110] sm:$0xff]
    %v391 = vld [vmem:[%s4 + $0x118] sm:$0xff]
    %v392 = vld [vmem:[%s4 + $0x120] sm:$0xff]
    %v393 = vld [vmem:[%s4 + $0x128] sm:$0xff]
    %v394 = vld [vmem:[%s4 + $0x130] sm:$0xff]
    %v395 = vld [vmem:[%s4 + $0x138] sm:$0xff]
    %v396 = vld [vmem:[%s4 + $0x140] sm:$0xff]
    %v397 = vld [vmem:[%s4 + $0x148] sm:$0xff]
    %v398 = vld [vmem:[%s4 + $0x150] sm:$0xff]
    %v399 = vld [vmem:[%s4 + $0x158] sm:$0xff]
    %v400 = vld [vmem:[%s4 + $0x160] sm:$0xff]
    %v401 = vld [vmem:[%s4 + $0x168] sm:$0xff]
    %v402 = vld [vmem:[%s4 + $0x170] sm:$0xff]
    %v403 = vld [vmem:[%s4 + $0x178] sm:$0xff]
    %v404 = vld [vmem:[%s4 + $0x180] sm:$0xff]
    %v405 = vld [vmem:[%s4 + $0x188] sm:$0xff]
    %v406 = vld [vmem:[%s4 + $0x190] sm:$0xff]
    %v407 = vld [vmem:[%s4 + $0x198] sm:$0xff]
    %v408 = vld [vmem:[%s4 + $0x1a0] sm:$0xff]
    %v409 = vld [vmem:[%s4 + $0x1a8] sm:$0xff]
    %v410 = vld [vmem:[%s4 + $0x1b0] sm:$0xff]
    %v411 = vld [vmem:[%s4 + $0x1b8] sm:$0xff]
    %v412 = vld [vmem:[%s4 + $0x1c0] sm:$0xff]
    %v413 = vld [vmem:[%s4 + $0x1c8] sm:$0xff]
    %v414 = vld [vmem:[%s4 + $0x1d0] sm:$0xff]
    %v415 = vld [vmem:[%s4 + $0x1d8] sm:$0xff]
    %v416 = vld [vmem:[%s4 + $0x1e0] sm:$0xff]
    %v417 = vld [vmem:[%s4 + $0x1e8] sm:$0xff]
    %v418 = vld [vmem:[%s4 + $0x1f0] sm:$0xff]
    %v419 = vld [vmem:[%s4 + $0x1f8] sm:$0xff]
    %v420 = vld [vmem:[%s5] sm:$0x1]
    %v422 = vlaneseq
    %v423 = vshrl.u32 %v422, 7
    %v424 = vsub.s32 0, %v423
    %v425 = vrot.slane %v420, %v424
    %427 = vmatprep.subr.mxu0 0.0
    %428 = vmatpush1.msra.mxu0 %v356
    %429 = vmatprep.subr.mxu0 0.0
    %430 = vmatpush1.msra.mxu0 %v357
    %431 = vmatprep.subr.mxu0 0.0
    %432 = vmatpush1.msra.mxu0 %v358
    %433 = vmatprep.subr.mxu0 0.0
    %434 = vmatpush1.msra.mxu0 %v359
    %435 = vmatprep.subr.mxu0 0.0
    %436 = vmatpush1.msra.mxu0 %v360
    %437 = vmatprep.subr.mxu0 0.0
    %438 = vmatpush1.msra.mxu0 %v361
    %439 = vmatprep.subr.mxu0 0.0
    %440 = vmatpush1.msra.mxu0 %v362
    %441 = vmatprep.subr.mxu0 0.0
    %442 = vmatpush1.msra.mxu0 %v363
    %443 = vmatprep.subr.mxu0 0.0
    %444 = vmatpush1.msra.mxu0 %v364
    %445 = vmatprep.subr.mxu0 0.0
    %446 = vmatpush1.msra.mxu0 %v365
    %447 = vmatprep.subr.mxu0 0.0
    %448 = vmatpush1.msra.mxu0 %v366
    %449 = vmatprep.subr.mxu0 0.0
    %450 = vmatpush1.msra.mxu0 %v367
    %451 = vmatprep.subr.mxu0 0.0
    %452 = vmatpush1.msra.mxu0 %v368
    %453 = vmatprep.subr.mxu0 0.0
    %454 = vmatpush1.msra.mxu0 %v369
    %455 = vmatprep.subr.mxu0 0.0
    %456 = vmatpush1.msra.mxu0 %v370
    %457 = vmatprep.subr.mxu0 0.0
    %458 = vmatpush1.msra.mxu0 %v371
    %459 = vmatprep.subr.mxu0 0.0
    %460 = vmatpush1.msra.mxu0 %v372
    %461 = vmatprep.subr.mxu0 0.0
    %462 = vmatpush1.msra.mxu0 %v373
    %463 = vmatprep.subr.mxu0 0.0
    %464 = vmatpush1.msra.mxu0 %v374
    %465 = vmatprep.subr.mxu0 0.0
    %466 = vmatpush1.msra.mxu0 %v375
    %467 = vmatprep.subr.mxu0 0.0
    %468 = vmatpush1.msra.mxu0 %v376
    %469 = vmatprep.subr.mxu0 0.0
    %470 = vmatpush1.msra.mxu0 %v377
    %471 = vmatprep.subr.mxu0 0.0
    %472 = vmatpush1.msra.mxu0 %v378
    %473 = vmatprep.subr.mxu0 0.0
    %474 = vmatpush1.msra.mxu0 %v379
    %475 = vmatprep.subr.mxu0 0.0
    %476 = vmatpush1.msra.mxu0 %v380
    %477 = vmatprep.subr.mxu0 0.0
    %478 = vmatpush1.msra.mxu0 %v381
    %479 = vmatprep.subr.mxu0 0.0
    %480 = vmatpush1.msra.mxu0 %v382
    %481 = vmatprep.subr.mxu0 0.0
    %482 = vmatpush1.msra.mxu0 %v383
    %483 = vmatprep.subr.mxu0 0.0
    %484 = vmatpush1.msra.mxu0 %v384
    %485 = vmatprep.subr.mxu0 0.0
    %486 = vmatpush1.msra.mxu0 %v385
    %487 = vmatprep.subr.mxu0 0.0
    %488 = vmatpush1.msra.mxu0 %v386
    %489 = vmatprep.subr.mxu0 0.0
    %490 = vmatpush1.msra.mxu0 %v387
    %491 = vmatprep.mubr.f32.mxu0 %v353
    %492 = vmatmul.mubr.f32.gmra.mrb[0].mxu0 %v352
    %v493 = vpop.f32.mrb[0].mxu0
    %v494 = vadd.f32 %v425, %v493
    %v495 = vpop.f32.mrb[0].mxu0
    %496 = vdwg.mxu0
    %497 = vmatprep.subr.mxu0 0.0
    %498 = vmatpush1.msra.mxu0 %v388
    %499 = vmatprep.subr.mxu0 0.0
    %500 = vmatpush1.msra.mxu0 %v389
    %501 = vmatprep.subr.mxu0 0.0
    %502 = vmatpush1.msra.mxu0 %v390
    %503 = vmatprep.subr.mxu0 0.0
    %504 = vmatpush1.msra.mxu0 %v391
    %505 = vmatprep.subr.mxu0 0.0
    %506 = vmatpush1.msra.mxu0 %v392
    %507 = vmatprep.subr.mxu0 0.0
    %508 = vmatpush1.msra.mxu0 %v393
    %509 = vmatprep.subr.mxu0 0.0
    %510 = vmatpush1.msra.mxu0 %v394
    %511 = vmatprep.subr.mxu0 0.0
    %512 = vmatpush1.msra.mxu0 %v395
    %513 = vmatprep.subr.mxu0 0.0
    %514 = vmatpush1.msra.mxu0 %v396
    %515 = vmatprep.subr.mxu0 0.0
    %516 = vmatpush1.msra.mxu0 %v397
    %517 = vmatprep.subr.mxu0 0.0
    %518 = vmatpush1.msra.mxu0 %v398
    %519 = vmatprep.subr.mxu0 0.0
    %520 = vmatpush1.msra.mxu0 %v399
    %521 = vmatprep.subr.mxu0 0.0
    %522 = vmatpush1.msra.mxu0 %v400
    %523 = vmatprep.subr.mxu0 0.0
    %524 = vmatpush1.msra.mxu0 %v401
    %525 = vmatprep.subr.mxu0 0.0
    %526 = vmatpush1.msra.mxu0 %v402
    %527 = vmatprep.subr.mxu0 0.0
    %528 = vmatpush1.msra.mxu0 %v403
    %529 = vmatprep.subr.mxu0 0.0
    %530 = vmatpush1.msra.mxu0 %v404
    %531 = vmatprep.subr.mxu0 0.0
    %532 = vmatpush1.msra.mxu0 %v405
    %533 = vmatprep.subr.mxu0 0.0
    %534 = vmatpush1.msra.mxu0 %v406
    %535 = vmatprep.subr.mxu0 0.0
    %536 = vmatpush1.msra.mxu0 %v407
    %537 = vmatprep.subr.mxu0 0.0
    %538 = vmatpush1.msra.mxu0 %v408
    %539 = vmatprep.subr.mxu0 0.0
    %540 = vmatpush1.msra.mxu0 %v409
    %541 = vmatprep.subr.mxu0 0.0
    %542 = vmatpush1.msra.mxu0 %v410
    %543 = vmatprep.subr.mxu0 0.0
    %544 = vmatpush1.msra.mxu0 %v411
    %545 = vmatprep.subr.mxu0 0.0
    %546 = vmatpush1.msra.mxu0 %v412
    %547 = vmatprep.subr.mxu0 0.0
    %548 = vmatpush1.msra.mxu0 %v413
    %549 = vmatprep.subr.mxu0 0.0
    %550 = vmatpush1.msra.mxu0 %v414
    %551 = vmatprep.subr.mxu0 0.0
    %552 = vmatpush1.msra.mxu0 %v415
    %553 = vmatprep.subr.mxu0 0.0
    %554 = vmatpush1.msra.mxu0 %v416
    %555 = vmatprep.subr.mxu0 0.0
    %556 = vmatpush1.msra.mxu0 %v417
    %557 = vmatprep.subr.mxu0 0.0
    %558 = vmatpush1.msra.mxu0 %v418
    %559 = vmatprep.subr.mxu0 0.0
    %560 = vmatpush1.msra.mxu0 %v419
    %561 = vmatprep.mubr.f32.mxu0 %v355
    %562 = vmatmul.mubr.f32.gmra.mrb[0].mxu0 %v354
    %v563 = vpop.f32.mrb[0].mxu0
    %v564 = vadd.f32 %v494, %v563
    %v565 = vpop.f32.mrb[0].mxu0
    %566 = vdwg.mxu0
    %v567 = vmax.f32 %v564, 0.0
    %v568 = vld [vmem:[%s0] sm:$0xff]
    %v569 = vld [vmem:[%s6] sm:$0xff]
    %v570 = vld [vmem:[%s6 + $0x8] sm:$0xff]
    %v571 = vld [vmem:[%s7] sm:$0xff]
    %vm572 = vcmask 64512
    %v574 = vsel %vm572, %v567, 0
    %576 = vmatprep.subr.mxu0 0.0
    %577 = vmatpush1.msra.mxu0 %v571
    %578 = vmatprep.subr.mxu0 0.0
    %579 = vmatpush1.msra.mxu0 0.0
    %580 = vmatprep.subr.mxu0 0.0
    %581 = vmatpush1.msra.mxu0 0.0
    %582 = vmatprep.subr.mxu0 0.0
    %583 = vmatpush1.msra.mxu0 0.0
    %584 = vmatprep.subr.mxu0 0.0
    %585 = vmatpush1.msra.mxu0 0.0
    %586 = vmatprep.subr.mxu0 0.0
    %587 = vmatpush1.msra.mxu0 0.0
    %588 = vmatprep.subr.mxu0 0.0
    %589 = vmatpush1.msra.mxu0 0.0
    %590 = vmatprep.subr.mxu0 0.0
    %591 = vmatpush1.msra.mxu0 0.0
    %592 = vmatprep.subr.mxu0 0.0
    %593 = vmatpush1.msra.mxu0 0.0
    %594 = vmatprep.subr.mxu0 0.0
    %595 = vmatpush1.msra.mxu0 0.0
    %596 = vmatprep.subr.mxu0 0.0
    %597 = vmatpush1.msra.mxu0 0.0
    %598 = vmatprep.subr.mxu0 0.0
    %599 = vmatpush1.msra.mxu0 0.0
    %600 = vmatprep.subr.mxu0 0.0
    %601 = vmatpush1.msra.mxu0 0.0
    %602 = vmatprep.subr.mxu0 0.0
    %603 = vmatpush1.msra.mxu0 0.0
    %604 = vmatprep.subr.mxu0 0.0
    %605 = vmatpush1.msra.mxu0 0.0
    %606 = vmatprep.subr.mxu0 0.0
    %607 = vmatpush1.msra.mxu0 0.0
    %608 = vmatprep.subr.mxu0 0.0
    %609 = vmatpush1.msra.mxu0 0.0
    %610 = vmatprep.subr.mxu0 0.0
    %611 = vmatpush1.msra.mxu0 0.0
    %612 = vmatprep.subr.mxu0 0.0
    %613 = vmatpush1.msra.mxu0 0.0
    %614 = vmatprep.subr.mxu0 0.0
    %615 = vmatpush1.msra.mxu0 0.0
    %616 = vmatprep.subr.mxu0 0.0
    %617 = vmatpush1.msra.mxu0 0.0
    %618 = vmatprep.subr.mxu0 0.0
    %619 = vmatpush1.msra.mxu0 0.0
    %620 = vmatprep.subr.mxu0 0.0
    %621 = vmatpush1.msra.mxu0 0.0
    %622 = vmatprep.subr.mxu0 0.0
    %623 = vmatpush1.msra.mxu0 0.0
    %624 = vmatprep.subr.mxu0 0.0
    %625 = vmatpush1.msra.mxu0 0.0
    %626 = vmatprep.subr.mxu0 0.0
    %627 = vmatpush1.msra.mxu0 0.0
    %628 = vmatprep.subr.mxu0 0.0
    %629 = vmatpush1.msra.mxu0 0.0
    %630 = vmatprep.subr.mxu0 0.0
    %631 = vmatpush1.msra.mxu0 0.0
    %632 = vmatprep.subr.mxu0 0.0
    %633 = vmatpush1.msra.mxu0 0.0
    %634 = vmatprep.subr.mxu0 0.0
    %635 = vmatpush1.msra.mxu0 0.0
    %636 = vmatprep.subr.mxu0 0.0
    %637 = vmatpush1.msra.mxu0 0.0
    %638 = vmatprep.subr.mxu0 0.0
    %639 = vmatpush1.msra.mxu0 0.0
    %640 = vmatprep.mubr.f32.mxu0 0.0
    %641 = vmatmul.mubr.f32.gmra.mrb[0].mxu0 %v574
    %v642 = vpop.f32.mrb[0].mxu0
    %v643 = vadd.f32 0.0, %v642
    %v644 = vpop.f32.mrb[0].mxu0
    %645 = vdwg.mxu0
    %vm646 = vcmask 130048
    %v648 = vsel %vm646, %v568, 0
    %650 = vmatprep.subr.mxu0 0.0
    %651 = vmatpush1.msra.mxu0 %v569
    %652 = vmatprep.subr.mxu0 0.0
    %653 = vmatpush1.msra.mxu0 %v570
    %654 = vmatprep.subr.mxu0 0.0
    %655 = vmatpush1.msra.mxu0 0.0
    %656 = vmatprep.subr.mxu0 0.0
    %657 = vmatpush1.msra.mxu0 0.0
    %658 = vmatprep.subr.mxu0 0.0
    %659 = vmatpush1.msra.mxu0 0.0
    %660 = vmatprep.subr.mxu0 0.0
    %661 = vmatpush1.msra.mxu0 0.0
    %662 = vmatprep.subr.mxu0 0.0
    %663 = vmatpush1.msra.mxu0 0.0
    %664 = vmatprep.subr.mxu0 0.0
    %665 = vmatpush1.msra.mxu0 0.0
    %666 = vmatprep.subr.mxu0 0.0
    %667 = vmatpush1.msra.mxu0 0.0
    %668 = vmatprep.subr.mxu0 0.0
    %669 = vmatpush1.msra.mxu0 0.0
    %670 = vmatprep.subr.mxu0 0.0
    %671 = vmatpush1.msra.mxu0 0.0
    %672 = vmatprep.subr.mxu0 0.0
    %673 = vmatpush1.msra.mxu0 0.0
    %674 = vmatprep.subr.mxu0 0.0
    %675 = vmatpush1.msra.mxu0 0.0
    %676 = vmatprep.subr.mxu0 0.0
    %677 = vmatpush1.msra.mxu0 0.0
    %678 = vmatprep.subr.mxu0 0.0
    %679 = vmatpush1.msra.mxu0 0.0
    %680 = vmatprep.subr.mxu0 0.0
    %681 = vmatpush1.msra.mxu0 0.0
    %682 = vmatprep.subr.mxu0 0.0
    %683 = vmatpush1.msra.mxu0 0.0
    %684 = vmatprep.subr.mxu0 0.0
    %685 = vmatpush1.msra.mxu0 0.0
    %686 = vmatprep.subr.mxu0 0.0
    %687 = vmatpush1.msra.mxu0 0.0
    %688 = vmatprep.subr.mxu0 0.0
    %689 = vmatpush1.msra.mxu0 0.0
    %690 = vmatprep.subr.mxu0 0.0
    %691 = vmatpush1.msra.mxu0 0.0
    %692 = vmatprep.subr.mxu0 0.0
    %693 = vmatpush1.msra.mxu0 0.0
    %694 = vmatprep.subr.mxu0 0.0
    %695 = vmatpush1.msra.mxu0 0.0
    %696 = vmatprep.subr.mxu0 0.0
    %697 = vmatpush1.msra.mxu0 0.0
    %698 = vmatprep.subr.mxu0 0.0
    %699 = vmatpush1.msra.mxu0 0.0
    %700 = vmatprep.subr.mxu0 0.0
    %701 = vmatpush1.msra.mxu0 0.0
    %702 = vmatprep.subr.mxu0 0.0
    %703 = vmatpush1.msra.mxu0 0.0
    %704 = vmatprep.subr.mxu0 0.0
    %705 = vmatpush1.msra.mxu0 0.0
    %706 = vmatprep.subr.mxu0 0.0
    %707 = vmatpush1.msra.mxu0 0.0
    %708 = vmatprep.subr.mxu0 0.0
    %709 = vmatpush1.msra.mxu0 0.0
    %710 = vmatprep.subr.mxu0 0.0
    %711 = vmatpush1.msra.mxu0 0.0
    %712 = vmatprep.subr.mxu0 0.0
    %713 = vmatpush1.msra.mxu0 0.0
    %714 = vmatprep.mubr.f32.mxu0 0.0
    %715 = vmatmul.mubr.f32.gmra.mrb[0].mxu0 %v648
    %v716 = vpop.f32.mrb[0].mxu0
    %v717 = vadd.f32 %v643, %v716
    %v718 = vpop.f32.mrb[0].mxu0
    %719 = vdwg.mxu0
    %v720 = vld [vmem:[%s8] sm:$0x1]
    %v722 = vlaneseq
    %v723 = vshrl.u32 %v722, 7
    %v724 = vsub.s32 0, %v723
    %v725 = vrot.slane %v720, %v724
    %v727 = vadd.f32 %v717, %v725
    %v728 = vtanh.pop %v727
    %v729 = vld [vmem:[%s9] sm:$0xff]
    %v730 = vld [vmem:[%s9 + $0x8] sm:$0xff]
    %v731 = vld [vmem:[%s9 + $0x10] sm:$0xff]
    %v732 = vld [vmem:[%s9 + $0x18] sm:$0xff]
    %v733 = vld [vmem:[%s9 + $0x20] sm:$0xff]
    %v734 = vld [vmem:[%s9 + $0x28] sm:$0xff]
    %v735 = vld [vmem:[%s9 + $0x30] sm:$0xff]
    %v736 = vld [vmem:[%s9 + $0x38] sm:$0xff]
    %v737 = vld [vmem:[%s10] sm:$0x1]
    %v739 = vlaneseq
    %v740 = vshrl.u32 %v739, 7
    %v741 = vsub.s32 0, %v740
    %v742 = vrot.slane %v737, %v741
    %vm744 = vcmask 523264
    %v746 = vsel %vm744, %v728, 0
    %748 = vmatprep.subr.mxu0 0.0
    %749 = vmatpush1.msra.mxu0 %v729
    %750 = vmatprep.subr.mxu0 0.0
    %751 = vmatpush1.msra.mxu0 %v730
    %752 = vmatprep.subr.mxu0 0.0
    %753 = vmatpush1.msra.mxu0 %v731
    %754 = vmatprep.subr.mxu0 0.0
    %755 = vmatpush1.msra.mxu0 %v732
    %756 = vmatprep.subr.mxu0 0.0
    %757 = vmatpush1.msra.mxu0 %v733
    %758 = vmatprep.subr.mxu0 0.0
    %759 = vmatpush1.msra.mxu0 %v734
    %760 = vmatprep.subr.mxu0 0.0
    %761 = vmatpush1.msra.mxu0 %v735
    %762 = vmatprep.subr.mxu0 0.0
    %763 = vmatpush1.msra.mxu0 %v736
    %764 = vmatprep.subr.mxu0 0.0
    %765 = vmatpush1.msra.mxu0 0.0
    %766 = vmatprep.subr.mxu0 0.0
    %767 = vmatpush1.msra.mxu0 0.0
    %768 = vmatprep.subr.mxu0 0.0
    %769 = vmatpush1.msra.mxu0 0.0
    %770 = vmatprep.subr.mxu0 0.0
    %771 = vmatpush1.msra.mxu0 0.0
    %772 = vmatprep.subr.mxu0 0.0
    %773 = vmatpush1.msra.mxu0 0.0
    %774 = vmatprep.subr.mxu0 0.0
    %775 = vmatpush1.msra.mxu0 0.0
    %776 = vmatprep.subr.mxu0 0.0
    %777 = vmatpush1.msra.mxu0 0.0
    %778 = vmatprep.subr.mxu0 0.0
    %779 = vmatpush1.msra.mxu0 0.0
    %780 = vmatprep.subr.mxu0 0.0
    %781 = vmatpush1.msra.mxu0 0.0
    %782 = vmatprep.subr.mxu0 0.0
    %783 = vmatpush1.msra.mxu0 0.0
    %784 = vmatprep.subr.mxu0 0.0
    %785 = vmatpush1.msra.mxu0 0.0
    %786 = vmatprep.subr.mxu0 0.0
    %787 = vmatpush1.msra.mxu0 0.0
    %788 = vmatprep.subr.mxu0 0.0
    %789 = vmatpush1.msra.mxu0 0.0
    %790 = vmatprep.subr.mxu0 0.0
    %791 = vmatpush1.msra.mxu0 0.0
    %792 = vmatprep.subr.mxu0 0.0
    %793 = vmatpush1.msra.mxu0 0.0
    %794 = vmatprep.subr.mxu0 0.0
    %795 = vmatpush1.msra.mxu0 0.0
    %796 = vmatprep.subr.mxu0 0.0
    %797 = vmatpush1.msra.mxu0 0.0
    %798 = vmatprep.subr.mxu0 0.0
    %799 = vmatpush1.msra.mxu0 0.0
    %800 = vmatprep.subr.mxu0 0.0
    %801 = vmatpush1.msra.mxu0 0.0
    %802 = vmatprep.subr.mxu0 0.0
    %803 = vmatpush1.msra.mxu0 0.0
    %804 = vmatprep.subr.mxu0 0.0
    %805 = vmatpush1.msra.mxu0 0.0
    %806 = vmatprep.subr.mxu0 0.0
    %807 = vmatpush1.msra.mxu0 0.0
    %808 = vmatprep.subr.mxu0 0.0
    %809 = vmatpush1.msra.mxu0 0.0
    %810 = vmatprep.subr.mxu0 0.0
    %811 = vmatpush1.msra.mxu0 0.0
    %812 = vmatprep.mubr.f32.mxu0 0.0
    %813 = vmatmul.mubr.f32.gmra.mrb[0].mxu0 %v746
    %v814 = vpop.f32.mrb[0].mxu0
    %v815 = vadd.f32 %v742, %v814
    %v816 = vpop.f32.mrb[0].mxu0
    %817 = vdwg.mxu0
    %v818 = vtanh.pop %v815
    %v819 = vld [vmem:[%s11] sm:$0xff]
    %v820 = vld [vmem:[%s11 + $0x8] sm:$0xff]
    %v821 = vld [vmem:[%s12] sm:$0x1]
    %v823 = vlaneseq
    %v824 = vshrl.u32 %v823, 7
    %v825 = vsub.s32 0, %v824
    %v826 = vrot.slane %v821, %v825
    %v829 = vsel %vm646, %v818, 0
    %831 = vmatprep.subr.mxu0 0.0
    %832 = vmatpush1.msra.mxu0 %v819
    %833 = vmatprep.subr.mxu0 0.0
    %834 = vmatpush1.msra.mxu0 %v820
    %835 = vmatprep.subr.mxu0 0.0
    %836 = vmatpush1.msra.mxu0 0.0
    %837 = vmatprep.subr.mxu0 0.0
    %838 = vmatpush1.msra.mxu0 0.0
    %839 = vmatprep.subr.mxu0 0.0
    %840 = vmatpush1.msra.mxu0 0.0
    %841 = vmatprep.subr.mxu0 0.0
    %842 = vmatpush1.msra.mxu0 0.0
    %843 = vmatprep.subr.mxu0 0.0
    %844 = vmatpush1.msra.mxu0 0.0
    %845 = vmatprep.subr.mxu0 0.0
    %846 = vmatpush1.msra.mxu0 0.0
    %847 = vmatprep.subr.mxu0 0.0
    %848 = vmatpush1.msra.mxu0 0.0
    %849 = vmatprep.subr.mxu0 0.0
    %850 = vmatpush1.msra.mxu0 0.0
    %851 = vmatprep.subr.mxu0 0.0
    %852 = vmatpush1.msra.mxu0 0.0
    %853 = vmatprep.subr.mxu0 0.0
    %854 = vmatpush1.msra.mxu0 0.0
    %855 = vmatprep.subr.mxu0 0.0
    %856 = vmatpush1.msra.mxu0 0.0
    %857 = vmatprep.subr.mxu0 0.0
    %858 = vmatpush1.msra.mxu0 0.0
    %859 = vmatprep.subr.mxu0 0.0
    %860 = vmatpush1.msra.mxu0 0.0
    %861 = vmatprep.subr.mxu0 0.0
    %862 = vmatpush1.msra.mxu0 0.0
    %863 = vmatprep.subr.mxu0 0.0
    %864 = vmatpush1.msra.mxu0 0.0
    %865 = vmatprep.subr.mxu0 0.0
    %866 = vmatpush1.msra.mxu0 0.0
    %867 = vmatprep.subr.mxu0 0.0
    %868 = vmatpush1.msra.mxu0 0.0
    %869 = vmatprep.subr.mxu0 0.0
    %870 = vmatpush1.msra.mxu0 0.0
    %871 = vmatprep.subr.mxu0 0.0
    %872 = vmatpush1.msra.mxu0 0.0
    %873 = vmatprep.subr.mxu0 0.0
    %874 = vmatpush1.msra.mxu0 0.0
    %875 = vmatprep.subr.mxu0 0.0
    %876 = vmatpush1.msra.mxu0 0.0
    %877 = vmatprep.subr.mxu0 0.0
    %878 = vmatpush1.msra.mxu0 0.0
    %879 = vmatprep.subr.mxu0 0.0
    %880 = vmatpush1.msra.mxu0 0.0
    %881 = vmatprep.subr.mxu0 0.0
    %882 = vmatpush1.msra.mxu0 0.0
    %883 = vmatprep.subr.mxu0 0.0
    %884 = vmatpush1.msra.mxu0 0.0
    %885 = vmatprep.subr.mxu0 0.0
    %886 = vmatpush1.msra.mxu0 0.0
    %887 = vmatprep.subr.mxu0 0.0
    %888 = vmatpush1.msra.mxu0 0.0
    %889 = vmatprep.subr.mxu0 0.0
    %890 = vmatpush1.msra.mxu0 0.0
    %891 = vmatprep.subr.mxu0 0.0
    %892 = vmatpush1.msra.mxu0 0.0
    %893 = vmatprep.subr.mxu0 0.0
    %894 = vmatpush1.msra.mxu0 0.0
    %895 = vmatprep.mubr.f32.mxu0 0.0
    %896 = vmatmul.mubr.f32.gmra.mrb[0].mxu0 %v829
    %v897 = vpop.f32.mrb[0].mxu0
    %v898 = vadd.f32 %v826, %v897
    %v899 = vpop.f32.mrb[0].mxu0
    %900 = vdwg.mxu0
    %vm901 = vcmask 31744
    %v902 = vsel %vm901, %v898, -inf
    %903 = vmax.xlane.f32.xlu0 %v902
    %v904 = vpop.xlane.xlu0 %903
    %v905 = vsub.f32 %v898, %v904
    %v906 = vmul.f32 %v905, 1.442695
    %v907 = vpow.pop %v906
    %v908 = vsel %vm901, %v907, 0.0
    %909 = vadd.xlane.f32.xlu0 %v908
    %v910 = vpop.xlane.xlu0 %909
    %v911 = vrcp.pop %v910
    %v912 = vmul.f32 %v907, %v911
    %913 = vst.msk [vmem:[%s13] sm:$0xff] %vm901, %v912
    // Predicated region
    $region58: #{tpu_custom_call.1} parent=1 // pred_check
      _
    $region59: #{tpu_custom_call.1} parent=1 // pred_check_branch
      %915 = sbr.rel (0) target = $region61
    $region60: #{tpu_custom_call.1} parent=1 // pred_region
      _
    $region61: #{tpu_custom_call.1} parent=1 // pred_fallthru
      _
    // Predicated region
    $region62: #{tpu_custom_call.1} parent=1 // pred_check
      _
    $region63: #{tpu_custom_call.1} parent=1 // pred_check_branch
      %917 = sbr.rel (0) target = $region65
    $region64: #{tpu_custom_call.1} parent=1 // pred_region
      _
    $region65: #{tpu_custom_call.1} parent=1 // pred_fallthru
      _
    %918 = vsyncpa [#allocation3], 1

</llo_original>
